<compile_context>
chip_gen: v7x
topology: tpu7x:2x2x1
jax: 0.10.0
libtpu: 0.0.40
codegen_flags: <defaults>
</compile_context>

<pallas_src>
import jax
import jax.numpy as jnp
from jax.experimental import pallas as pl
from jax.experimental.pallas import tpu as pltpu


def _make_hbm_copy_kernel(num_chunks, chunk_rows):
    """Build a kernel that copies (rows, L) HBM->HBM via `num_chunks` DMAs."""

    def kernel(x_ref, o_ref, sems):
        if num_chunks == 1:
            # Contiguous whole-array copy: a single DMA descriptor.
            cp = pltpu.make_async_copy(x_ref, o_ref, sems.at[0])
            cp.start()
            cp.wait()
            return

        # Issue all chunked HBM->HBM copies first (multiple DMA engines in
        # flight), then wait for all of them.  Offsets are static Python ints.
        copies = []
        for c in range(num_chunks):
            r0 = c * chunk_rows
            cp = pltpu.make_async_copy(
                x_ref.at[pl.ds(r0, chunk_rows), :],
                o_ref.at[pl.ds(r0, chunk_rows), :],
                sems.at[c],
            )
            cp.start()
            copies.append(cp)
        for cp in copies:
            cp.wait()

    return kernel


def reshape_expand_token(
    x,
    expand_token,
    token_dim,
    *,
    materialize=False,
    min_kernel_bytes=1 << 20,
    min_chunk_bytes=1 << 20,
    max_outstanding_dma=4,
):
    """Pallas equivalent of ReshapeExpandToken.forward.

    materialize=False (default): zero-cost metadata-only reshape — this is
        what the PyTorch module's contiguous `.reshape` costs as well.
    materialize=True : produce a freshly materialized output buffer via
        chunked HBM->HBM DMA (no VMEM round-trip).
    """
    total = x.size
    group = expand_token * token_dim
    if total % group != 0:
        raise ValueError(
            "total element count must be divisible by expand_token * token_dim"
        )
    b_out = total // group
    out_shape3 = (b_out, expand_token, token_dim)

    if not materialize:
        # Contiguous row-major reshape == torch.reshape semantics; free in XLA.
        return jnp.reshape(x, out_shape3)

    dsize = jnp.dtype(x.dtype).itemsize
    total_bytes = total * dsize

    # Tiny tensors: fixed kernel-launch overhead dwarfs the copy itself.
    if total_bytes < min_kernel_bytes:
        return jnp.reshape(x, out_shape3)

    # --- lane-dense flat 2D view (rows, L): largest multiple of 128 dividing
    #     `total`, capped at 32768 lanes; fall back to token_dim otherwise ---
    L = token_dim
    if total % 128 == 0:
        k = total // 128
        best = 1
        for d in range(1, min(k, 256) + 1):  # cap L at 256 * 128 = 32768
            if k % d == 0:
                best = d
        L = 128 * best
    rows = total // L

    # --- chunk rows into equal HBM->HBM DMAs (no ragged tail), each >= ~1 MiB,
    #     at most `max_outstanding_dma` outstanding ---
    num_chunks = 1
    for cand in range(max_outstanding_dma, 1, -1):
        if rows % cand == 0 and (total_bytes // cand) >= min_chunk_bytes:
            num_chunks = cand
            break
    chunk_rows = rows // num_chunks

    x2d = jnp.reshape(x, (rows, L))  # free (metadata-only) wrapper reshape

    out2d = pl.pallas_call(
        _make_hbm_copy_kernel(num_chunks, chunk_rows),
        out_shape=jax.ShapeDtypeStruct((rows, L), x.dtype),
        in_specs=[pl.BlockSpec(memory_space=pl.ANY)],   # raw HBM ref, no auto-DMA
        out_specs=pl.BlockSpec(memory_space=pl.ANY),
        scratch_shapes=[pltpu.SemaphoreType.DMA((num_chunks,))],
        cost_estimate=pl.CostEstimate(
            flops=0, transcendentals=0, bytes_accessed=2 * total_bytes
        ),
    )(x2d)

    # Free reshape back to the module's output layout.
    return jnp.reshape(out2d, out_shape3)


if __name__ == "__main__":
    key = jax.random.PRNGKey(0)
    expand_token, token_dim = 8, 32

    # --- test 1: small shape consistent with the module's forward ---
    # x: (B, C, H, W) = (2, 4, 16, 16) -> 2048 elements -> output (8, 8, 32)
    B, C, H, W = 2, 4, 16, 16
    x = jax.random.normal(key, (B, C, H, W), dtype=jnp.float32)
    ref = jnp.reshape(x, (-1, expand_token, token_dim))

    # Default (recommended) path: metadata-only reshape.
    y0 = reshape_expand_token(x, expand_token, token_dim)
    y0 = jax.block_until_ready(y0)
    assert y0.shape == ref.shape and y0.dtype == x.dtype
    assert jnp.array_equal(y0, ref)

    # Materialized path: force the Pallas HBM->HBM DMA kernel even for a
    # small input (min_kernel_bytes=0) so the kernel is exercised on TPU.
    y1 = reshape_expand_token(
        x, expand_token, token_dim, materialize=True, min_kernel_bytes=0
    )
    y1 = jax.block_until_ready(y1)
    assert y1.shape == (B * C * H * W // (expand_token * token_dim),
                        expand_token, token_dim), y1.shape
    assert y1.dtype == x.dtype
    assert jnp.array_equal(y1, ref), "kernel output mismatch vs reshape reference"

    # --- test 2: slightly larger input to exercise the multi-DMA chunked path
    # (rows > 1, 2 outstanding HBM->HBM copies) ---
    key2 = jax.random.PRNGKey(0)
    x2 = jax.random.normal(key2, (2, 8, 64, 64), dtype=jnp.float32)  # 65536 elems
    ref2 = jnp.reshape(x2, (-1, expand_token, token_dim))
    y2 = reshape_expand_token(
        x2, expand_token, token_dim,
        materialize=True, min_kernel_bytes=0, min_chunk_bytes=1024,
    )
    y2 = jax.block_until_ready(y2)
    assert y2.shape == ref2.shape and y2.dtype == x2.dtype
    assert jnp.array_equal(y2, ref2), "chunked DMA kernel mismatch vs reference"

    print("KERNEL_OK")
</pallas_src>

<mosaic_0001>
module attributes {stable_mosaic.version = 11 : i64} {
  func.func @kernel(%arg0: memref<1x2048xf32, #tpu.memory_space<any>>, %arg1: memref<1x2048xf32, #tpu.memory_space<any>>, %arg2: memref<1x!tpu.dma_semaphore, #tpu.memory_space<semaphore_mem>>) attributes {dimension_semantics = [], scalar_prefetch = 0 : i64, scratch_operands = 1 : i64, tpu.core_type = #tpu.core_type<tc>} {
    %c0_i32 = arith.constant 0 : i32
    %0 = tpu.memref_slice %arg2[%c0_i32] : memref<1x!tpu.dma_semaphore, #tpu.memory_space<semaphore_mem>> -> memref<1x!tpu.dma_semaphore, #tpu.memory_space<semaphore_mem>>
    %1 = tpu.memref_squeeze %0 : memref<1x!tpu.dma_semaphore, #tpu.memory_space<semaphore_mem>> -> memref<!tpu.dma_semaphore, #tpu.memory_space<semaphore_mem>>
    tpu.enqueue_dma source(%arg0 : memref<1x2048xf32, #tpu.memory_space<any>>) target(%arg1 : memref<1x2048xf32, #tpu.memory_space<any>>) target_semaphore(%1 : memref<!tpu.dma_semaphore, #tpu.memory_space<semaphore_mem>>)
    %c0_i32_0 = arith.constant 0 : i32
    %2 = tpu.memref_slice %arg2[%c0_i32_0] : memref<1x!tpu.dma_semaphore, #tpu.memory_space<semaphore_mem>> -> memref<1x!tpu.dma_semaphore, #tpu.memory_space<semaphore_mem>>
    %3 = tpu.memref_squeeze %2 : memref<1x!tpu.dma_semaphore, #tpu.memory_space<semaphore_mem>> -> memref<!tpu.dma_semaphore, #tpu.memory_space<semaphore_mem>>
    tpu.wait_dma2 semaphore(%3 : memref<!tpu.dma_semaphore, #tpu.memory_space<semaphore_mem>>) src(%arg0 : memref<1x2048xf32, #tpu.memory_space<any>>) dst(%arg1 : memref<1x2048xf32, #tpu.memory_space<any>>)
    return
  }
}

</mosaic_0001>

<llo_original>
// kernel: tpu_custom_call.1
$region0: #{tpu_custom_call.1}
  #allocation0 [shape = 'u32[]', space=smem, size = 0x4, offset = 0x4, fixed_abs, tag = 'smem constant byte address 0x4 - core index']
  #allocation1 [shape = 'u32[144,128]{1,0:T(1,128)}', space=vmem, size = 0x12000, scoped, tag = 'internal scratch']
  #allocation2 [shape = 's32[1]{0}', space=sflag, size = 0x4, scoped, tag = 'scratch operand']
  #allocation3 [shape = 's32[]', space=sflag, size = 0x4, offset = 0, fixed_abs, tag = 'sflag constant byte address 0x0 - dummy sync flag']
  #allocation4 [shape = 'u32[0]{0}', space=smem, size = 0, offset = 0, fixed_abs, tag = 'smem constant byte address 0x0 - null']
  %s0 = inlined_call_operand.hbm [shape: f32[1,2048], index: 0, kind: input, shape index: {}]
  %s1 = inlined_call_operand.hbm [shape: f32[1,2048], index: 1, kind: output, shape index: {}]
  %s2 = sld [smem:[#allocation0]]
  $region2: #{tpu_custom_call.1} parent=0
    _
  %s4 = ssub.s32 1, %s2
  %s5 = scalar_select 0, %s4, %s2
  %s7 = sshll.u32 1, 14
  %s8 = sxor.u32 4294967295, %s7
  %s11 = sshll.u32 3, 24
  %s12 = sxor.u32 4294967295, %s11
  %s13 = sand.u32 0, %s12
  %s15 = sor.u32 %s13, 0
  %18 = dma.general %s0, 256, %s1, [#allocation2], [#allocation3], [#allocation4], %s15, 0
  %s19 = smul.u32 1, 16
  %s20 = sshll.u32 %s19, 4
  %21 = dma.done [#allocation2], %s20
  %22 = vsyncmov [#allocation2]
  %s23 = vpop.sfrf %22
  %p24 = scmp.eq.s32.totalorder %s23, 0
  %p25 = pneg %p24
  %27 = shalt.err (%p25)

</llo_original>
